<compile_context>
chip_gen: v7x
topology: tpu7x:2x2x1
jax: 0.10.0
libtpu: 0.0.40
codegen_flags: <defaults>
</compile_context>

<pallas_src>
import functools

import jax
import jax.numpy as jnp
from jax.experimental import pallas as pl
from jax.experimental.pallas import tpu as pltpu


def channel_attention_kernel(x_ref, w1_ref, w2_ref, o_ref,
                             sum_acc, max_acc,
                             *, hw_total, t_hw, lane_blk, rem):
    # x_ref:   (1, C, t_hw)   one HW tile of one batch element (native dtype,
    #                         C on sublanes, HW on lanes)
    # w1_ref:  (Ch, C)        fc1 weight, native shape
    # w2_ref:  (C, Ch)        fc2 weight, native shape
    # o_ref:   (1, C, 1)
    # sum_acc / max_acc: (C, lane_blk) f32 per-lane running reductions over HW.
    hw_idx = pl.program_id(1)
    n_hw = pl.num_programs(1)
    n_lb = t_hw // lane_blk

    @pl.when(hw_idx == 0)
    def _init():
        sum_acc[...] = jnp.zeros_like(sum_acc)
        max_acc[...] = jnp.full_like(max_acc, -jnp.inf)

    def reduce_tile(valid_cols):
        # valid_cols: STATIC number of valid HW columns in this tile.
        psum = None
        pmax = None
        for m in range(n_lb):
            lo = m * lane_blk
            if lo >= valid_cols:          # fully out-of-range lane block: skip
                break
            blk = x_ref[0, :, lo:lo + lane_blk].astype(jnp.float32)  # (C, lane_blk)
            if lo + lane_blk > valid_cols:                 # partially valid block
                col = jax.lax.broadcasted_iota(jnp.int32, blk.shape, 1)
                valid = col < (valid_cols - lo)
                blk_s = jnp.where(valid, blk, 0.0)
                blk_m = jnp.where(valid, blk, -jnp.inf)
            else:                                          # interior: no masking
                blk_s = blk
                blk_m = blk
            psum = blk_s if psum is None else psum + blk_s
            pmax = blk_m if pmax is None else jnp.maximum(pmax, blk_m)
        sum_acc[...] += psum
        max_acc[...] = jnp.maximum(max_acc[...], pmax)

    if rem == t_hw:
        # HW divides evenly into tiles: every tile takes the unmasked path.
        reduce_tile(t_hw)
    elif n_hw == 1:
        reduce_tile(rem)
    else:
        @pl.when(hw_idx < n_hw - 1)
        def _interior():
            reduce_tile(t_hw)

        @pl.when(hw_idx == n_hw - 1)
        def _last():
            reduce_tile(rem)

    @pl.when(hw_idx == n_hw - 1)
    def _finalize():
        # Single cross-lane reduce per batch element.
        avg = jnp.sum(sum_acc[...], axis=1, keepdims=True) * (1.0 / hw_total)  # (C,1)
        mx = jnp.max(max_acc[...], axis=1, keepdims=True)                      # (C,1)
        w1 = w1_ref[...].astype(jnp.float32)                                   # (Ch,C)
        w2 = w2_ref[...].astype(jnp.float32)                                   # (C,Ch)
        # fc2 is linear => fc2(relu(fc1(a))) + fc2(relu(fc1(m)))
        #                = W2 @ (relu(W1@a) + relu(W1@m))
        h = (jnp.maximum(jnp.dot(w1, avg, preferred_element_type=jnp.float32), 0.0)
             + jnp.maximum(jnp.dot(w1, mx, preferred_element_type=jnp.float32), 0.0))
        y = jnp.dot(w2, h, preferred_element_type=jnp.float32)                 # (C,1)
        o_ref[...] = jax.nn.sigmoid(y)[None].astype(o_ref.dtype)


def channel_attention(x, w1, w2, *, target_tile_bytes=2 * 1024 * 1024):
    """x: (B, C, H, W) NCHW; w1: (C//16, C); w2: (C, C//16). Returns (B, C, 1, 1)."""
    B, C, H, W = x.shape
    HW = H * W
    Ch = w1.shape[0]
    assert w1.shape == (Ch, C) and w2.shape == (C, Ch)

    itemsize = jnp.dtype(x.dtype).itemsize

    # Spatial tile: HW sits on the 128-lane axis.  Aim for ~target_tile_bytes per
    # buffered tile (double-buffered this stays well inside the default scoped
    # VMEM on v5e/v6e/v7x); cap the static lane-block unroll at 64 vreg columns.
    if HW <= 128:
        t_hw = HW                       # full-extent block (any size is legal)
        lane_blk = HW
    else:
        t_hw = min(target_tile_bytes // max(1, C * itemsize), 64 * 128, HW)
        t_hw = max(128, (t_hw // 128) * 128)   # multiple of 128 lanes
        lane_blk = 128
    n_hw = (HW + t_hw - 1) // t_hw
    rem = HW - (n_hw - 1) * t_hw        # valid columns in the last tile (static)

    # Free reshape: NCHW is contiguous over (C, H*W). No transpose, no pad.
    x_flat = x.reshape(B, C, HW)

    kernel = functools.partial(
        channel_attention_kernel,
        hw_total=HW, t_hw=t_hw, lane_blk=lane_blk, rem=rem)

    w_bytes = (w1.size * jnp.dtype(w1.dtype).itemsize
               + w2.size * jnp.dtype(w2.dtype).itemsize)
    cost = pl.CostEstimate(
        flops=2 * B * HW * C + 8 * B * C * Ch,
        transcendentals=B * C,
        bytes_accessed=B * C * HW * itemsize + w_bytes + B * C * itemsize,
    )

    out = pl.pallas_call(
        kernel,
        out_shape=jax.ShapeDtypeStruct((B, C, 1), x.dtype),
        grid_spec=pltpu.PrefetchScalarGridSpec(
            num_scalar_prefetch=0,
            grid=(B, n_hw),
            in_specs=[
                pl.BlockSpec((1, C, t_hw), lambda b, h: (b, 0, h)),
                pl.BlockSpec((Ch, C), lambda b, h: (0, 0)),
                pl.BlockSpec((C, Ch), lambda b, h: (0, 0)),
            ],
            out_specs=pl.BlockSpec((1, C, 1), lambda b, h: (b, 0, 0)),
            scratch_shapes=[
                pltpu.VMEM((C, lane_blk), jnp.float32),   # per-lane running sum
                pltpu.VMEM((C, lane_blk), jnp.float32),   # per-lane running max
            ],
        ),
        compiler_params=pltpu.CompilerParams(
            dimension_semantics=("parallel", "arbitrary"),
        ),
        cost_estimate=cost,
    )(x_flat, w1, w2)

    return out.reshape(B, C, 1, 1)


def channel_attention_ref(x, w1, w2):
    """Pure-JAX reference matching the PyTorch module."""
    avg = jnp.mean(x, axis=(2, 3))                       # (B, C)
    mx = jnp.max(x, axis=(2, 3))                         # (B, C)

    def mlp(v):
        h = jnp.maximum(v @ w1.T, 0.0)                   # (B, C//16)
        return h @ w2.T                                  # (B, C)

    out = jax.nn.sigmoid(mlp(avg) + mlp(mx))
    return out[:, :, None, None]


def _run_case(key, B, C, H, W):
    kx, k1, k2 = jax.random.split(key, 3)
    Ch = C // 16
    x = jax.random.normal(kx, (B, C, H, W), dtype=jnp.float32)
    # fc1.weight: (C//16, C, 1, 1) -> (C//16, C); fc2.weight: (C, C//16, 1, 1) -> (C, C//16)
    w1 = jax.random.normal(k1, (Ch, C), dtype=jnp.float32) * 0.1
    w2 = jax.random.normal(k2, (C, Ch), dtype=jnp.float32) * 0.1

    out = channel_attention(x, w1, w2)
    jax.block_until_ready(out)
    ref = channel_attention_ref(x, w1, w2)
    assert out.shape == (B, C, 1, 1), out.shape
    assert jnp.allclose(out, ref, atol=1e-5, rtol=1e-5), \
        f"mismatch vs reference (B={B}, C={C}, H={H}, W={W})"


if __name__ == "__main__":
    # Case 1: lane-aligned HW (single tile, unmasked path).
    _run_case(jax.random.PRNGKey(0), B=2, C=32, H=16, W=16)
    # Case 2: ragged HW (multiple tiles + masked remainder tile), C not mult of 32.
    _run_case(jax.random.PRNGKey(1), B=2, C=48, H=15, W=13)
    # Case 3: HW < 128 (full-extent lane block) and B == 1.
    _run_case(jax.random.PRNGKey(2), B=1, C=32, H=7, W=9)

    print("KERNEL_OK")
</pallas_src>

<mosaic_0001>
module attributes {stable_mosaic.version = 11 : i64} {
  func.func @channel_attention_kernel(%arg0: i32, %arg1: i32, %arg2: memref<1x32x256xf32, #tpu.memory_space<vmem>>, %arg3: memref<2x32xf32, #tpu.memory_space<vmem>>, %arg4: memref<32x2xf32, #tpu.memory_space<vmem>>, %arg5: memref<1x32x1xf32, #tpu.memory_space<vmem>>, %arg6: memref<32x128xf32, #tpu.memory_space<vmem>>, %arg7: memref<32x128xf32, #tpu.memory_space<vmem>>) attributes {dimension_semantics = [#tpu.dimension_semantics<parallel>, #tpu.dimension_semantics<arbitrary>], iteration_bounds = array<i64: 2, 1>, scalar_prefetch = 0 : i64, scratch_operands = 2 : i64, tpu.core_type = #tpu.core_type<tc>, window_params = [{transform_indices = @transform_0, window_bounds = array<i64: 1, 32, 256>}, {pipeline_mode = #tpu.pipeline_mode<synchronous>, transform_indices = @transform_1, window_bounds = array<i64: 2, 32>}, {pipeline_mode = #tpu.pipeline_mode<synchronous>, transform_indices = @transform_2, window_bounds = array<i64: 32, 2>}, {transform_indices = @transform_3, window_bounds = array<i64: 1, 32, 1>}]} {
    %c0_i32 = arith.constant 0 : i32
    %0 = arith.cmpi eq, %arg1, %c0_i32 : i32
    %1 = arith.extui %0 : i1 to i32
    %c0_i32_0 = arith.constant 0 : i32
    %2 = arith.cmpi ne, %1, %c0_i32_0 : i32
    scf.if %2 {
      %cst = arith.constant 0.000000e+00 : f32
      %18 = vector.broadcast %cst : f32 to vector<32x128xf32>
      %c0_15 = arith.constant 0 : index
      %c0_16 = arith.constant 0 : index
      %19 = vector.load %arg6[%c0_15, %c0_16] : memref<32x128xf32, #tpu.memory_space<vmem>>, vector<32x128xf32>
      tpu.vector_store %arg6[%c0_15, %c0_16], %18 {strides = array<i32>} : memref<32x128xf32, #tpu.memory_space<vmem>>, vector<32x128xf32>,
      %cst_17 = arith.constant 0xFF800000 : f32
      %20 = vector.broadcast %cst_17 : f32 to vector<32x128xf32>
      %c0_18 = arith.constant 0 : index
      %c0_19 = arith.constant 0 : index
      %21 = vector.load %arg7[%c0_18, %c0_19] : memref<32x128xf32, #tpu.memory_space<vmem>>, vector<32x128xf32>
      tpu.vector_store %arg7[%c0_18, %c0_19], %20 {strides = array<i32>} : memref<32x128xf32, #tpu.memory_space<vmem>>, vector<32x128xf32>,
    } else {
    }
    %c0 = arith.constant 0 : index
    %c0_1 = arith.constant 0 : index
    %c0_2 = arith.constant 0 : index
    %3 = vector.load %arg2[%c0, %c0_1, %c0_2] : memref<1x32x256xf32, #tpu.memory_space<vmem>>, vector<1x32x128xf32>
    %4 = vector.shape_cast %3 : vector<1x32x128xf32> to vector<32x128xf32>
    %c0_3 = arith.constant 0 : index
    %c0_4 = arith.constant 0 : index
    %c128 = arith.constant 128 : index
    %5 = vector.load %arg2[%c0_3, %c0_4, %c128] : memref<1x32x256xf32, #tpu.memory_space<vmem>>, vector<1x32x128xf32>
    %6 = vector.shape_cast %5 : vector<1x32x128xf32> to vector<32x128xf32>
    %7 = arith.addf %4, %6 : vector<32x128xf32>
    %8 = arith.maximumf %4, %6 : vector<32x128xf32>
    %c0_5 = arith.constant 0 : index
    %c0_6 = arith.constant 0 : index
    %9 = vector.load %arg6[%c0_5, %c0_6] : memref<32x128xf32, #tpu.memory_space<vmem>>, vector<32x128xf32>
    %10 = arith.addf %9, %7 : vector<32x128xf32>
    %c0_7 = arith.constant 0 : index
    %c0_8 = arith.constant 0 : index
    %11 = vector.load %arg6[%c0_7, %c0_8] : memref<32x128xf32, #tpu.memory_space<vmem>>, vector<32x128xf32>
    tpu.vector_store %arg6[%c0_7, %c0_8], %10 {strides = array<i32>} : memref<32x128xf32, #tpu.memory_space<vmem>>, vector<32x128xf32>,
    %c0_9 = arith.constant 0 : index
    %c0_10 = arith.constant 0 : index
    %12 = vector.load %arg7[%c0_9, %c0_10] : memref<32x128xf32, #tpu.memory_space<vmem>>, vector<32x128xf32>
    %13 = arith.maximumf %12, %8 : vector<32x128xf32>
    %c0_11 = arith.constant 0 : index
    %c0_12 = arith.constant 0 : index
    %14 = vector.load %arg7[%c0_11, %c0_12] : memref<32x128xf32, #tpu.memory_space<vmem>>, vector<32x128xf32>
    tpu.vector_store %arg7[%c0_11, %c0_12], %13 {strides = array<i32>} : memref<32x128xf32, #tpu.memory_space<vmem>>, vector<32x128xf32>,
    %c0_i32_13 = arith.constant 0 : i32
    %15 = arith.cmpi eq, %arg1, %c0_i32_13 : i32
    %16 = arith.extui %15 : i1 to i32
    %c0_i32_14 = arith.constant 0 : i32
    %17 = arith.cmpi ne, %16, %c0_i32_14 : i32
    scf.if %17 {
      %c0_15 = arith.constant 0 : index
      %c0_16 = arith.constant 0 : index
      %18 = vector.load %arg6[%c0_15, %c0_16] : memref<32x128xf32, #tpu.memory_space<vmem>>, vector<32x128xf32>
      %cst = arith.constant dense<0.000000e+00> : vector<32xf32>
      %19 = vector.multi_reduction <add>, %18, %cst [1] : vector<32x128xf32> to vector<32xf32>
      %20 = vector.shape_cast %19 : vector<32xf32> to vector<32x1xf32>
      %cst_17 = arith.constant 3.906250e-03 : f32
      %21 = vector.broadcast %cst_17 : f32 to vector<32x1xf32>
      %22 = arith.mulf %20, %21 : vector<32x1xf32>
      %c0_18 = arith.constant 0 : index
      %c0_19 = arith.constant 0 : index
      %23 = vector.load %arg7[%c0_18, %c0_19] : memref<32x128xf32, #tpu.memory_space<vmem>>, vector<32x128xf32>
      %cst_20 = arith.constant dense<0xFF800000> : vector<32xf32>
      %24 = vector.multi_reduction <maximumf>, %23, %cst_20 [1] : vector<32x128xf32> to vector<32xf32>
      %25 = vector.shape_cast %24 : vector<32xf32> to vector<32x1xf32>
      %c0_21 = arith.constant 0 : index
      %c0_22 = arith.constant 0 : index
      %26 = vector.load %arg3[%c0_21, %c0_22] : memref<2x32xf32, #tpu.memory_space<vmem>>, vector<2x32xf32>
      %c0_23 = arith.constant 0 : index
      %c0_24 = arith.constant 0 : index
      %27 = vector.load %arg4[%c0_23, %c0_24] : memref<32x2xf32, #tpu.memory_space<vmem>>, vector<32x2xf32>
      %cst_25 = arith.constant dense<0.000000e+00> : vector<2x1xf32>
      %28 = tpu.matmul %26, %22, %cst_25 {dimension_numbers = #tpu.dot_dimension_numbers<[1], [0], [0], [1], [0, 0, 1, 1], [], []>} : vector<2x32xf32>, vector<32x1xf32>, vector<2x1xf32> -> vector<2x1xf32>
      %cst_26 = arith.constant 0.000000e+00 : f32
      %29 = vector.broadcast %cst_26 : f32 to vector<2x1xf32>
      %30 = arith.maximumf %28, %29 : vector<2x1xf32>
      %cst_27 = arith.constant dense<0.000000e+00> : vector<2x1xf32>
      %31 = tpu.matmul %26, %25, %cst_27 {dimension_numbers = #tpu.dot_dimension_numbers<[1], [0], [0], [1], [0, 0, 1, 1], [], []>} : vector<2x32xf32>, vector<32x1xf32>, vector<2x1xf32> -> vector<2x1xf32>
      %cst_28 = arith.constant 0.000000e+00 : f32
      %32 = vector.broadcast %cst_28 : f32 to vector<2x1xf32>
      %33 = arith.maximumf %31, %32 : vector<2x1xf32>
      %34 = arith.addf %30, %33 : vector<2x1xf32>
      %cst_29 = arith.constant dense<0.000000e+00> : vector<32x1xf32>
      %35 = tpu.matmul %27, %34, %cst_29 {dimension_numbers = #tpu.dot_dimension_numbers<[1], [0], [0], [1], [0, 0, 1, 1], [], []>} : vector<32x2xf32>, vector<2x1xf32>, vector<32x1xf32> -> vector<32x1xf32>
      %36 = arith.negf %35 : vector<32x1xf32>
      %37 = math.exp %36 : vector<32x1xf32>
      %cst_30 = arith.constant 1.000000e+00 : f32
      %38 = vector.broadcast %cst_30 : f32 to vector<32x1xf32>
      %39 = arith.addf %38, %37 : vector<32x1xf32>
      %40 = arith.divf %38, %39 : vector<32x1xf32>
      %41 = vector.shape_cast %40 : vector<32x1xf32> to vector<1x32x1xf32>
      %c0_31 = arith.constant 0 : index
      %c0_32 = arith.constant 0 : index
      %c0_33 = arith.constant 0 : index
      %42 = vector.load %arg5[%c0_31, %c0_32, %c0_33] : memref<1x32x1xf32, #tpu.memory_space<vmem>>, vector<1x32x1xf32>
      tpu.vector_store %arg5[%c0_31, %c0_32, %c0_33], %41 {strides = array<i32>} : memref<1x32x1xf32, #tpu.memory_space<vmem>>, vector<1x32x1xf32>,
    } else {
    }
    return
  }
  func.func @transform_0(%arg0: i32, %arg1: i32) -> (i32, i32, i32) {
    %c0_i32 = arith.constant 0 : i32
    %c0_i32_0 = arith.constant 0 : i32
    return %arg0, %c0_i32, %arg1 : i32, i32, i32
  }
  func.func @transform_1(%arg0: i32, %arg1: i32) -> (i32, i32) {
    %c0_i32 = arith.constant 0 : i32
    %c0_i32_0 = arith.constant 0 : i32
    %c0_i32_1 = arith.constant 0 : i32
    return %c0_i32, %c0_i32_0 : i32, i32
  }
  func.func @transform_2(%arg0: i32, %arg1: i32) -> (i32, i32) {
    %c0_i32 = arith.constant 0 : i32
    %c0_i32_0 = arith.constant 0 : i32
    %c0_i32_1 = arith.constant 0 : i32
    return %c0_i32, %c0_i32_0 : i32, i32
  }
  func.func @transform_3(%arg0: i32, %arg1: i32) -> (i32, i32, i32) {
    %c0_i32 = arith.constant 0 : i32
    %c0_i32_0 = arith.constant 0 : i32
    %c0_i32_1 = arith.constant 0 : i32
    return %arg0, %c0_i32, %c0_i32_0 : i32, i32, i32
  }
}

</mosaic_0001>

<llo_original>
// kernel: tpu_custom_call.1
$region0: #{tpu_custom_call.1}
  #allocation0 [shape = 'u32[]', space=smem, size = 0x4, offset = 0x4, fixed_abs, tag = 'smem constant byte address 0x4 - core index']
  #allocation1 [shape = 'u32[144,128]{1,0:T(1,128)}', space=vmem, size = 0x12000, scoped, tag = 'internal scratch']
  #allocation2 [shape = 'f32[32,128]{1,0:T(8,128)}', space=vmem, size = 0x4000, scoped, tag = 'scratch operand']
  #allocation3 [shape = 'f32[32,128]{1,0:T(8,128)}', space=vmem, size = 0x4000, scoped, tag = 'scratch operand']
  %s0 = inlined_call_operand.hbm [shape: f32[2,32,256], index: 0, kind: input, shape index: {}]
  %s1 = inlined_call_operand.vmem [shape: f32[2,32], index: 1, kind: input, shape index: {}]
  %s2 = inlined_call_operand.vmem [shape: f32[32,2], index: 2, kind: input, shape index: {}]
  %s3 = inlined_call_operand.vmem [shape: f32[2,32,1], index: 3, kind: output, shape index: {}]
  %s4 = sld [smem:[#allocation0]]
  $region57: #{tpu_custom_call.1} parent=0
    _
  %s6 = ssub.s32 1, %s4
  %s7 = scalar_select 0, %s6, %s4
  $region1: #{tpu_custom_call.1} parent=0
    #allocation4 [shape = 'u8[65536]{0}', space=vmem, size = 0x10000, scoped, tag = 'input window, operand 0']
    #allocation5 [shape = 's32[2]{0}', space=sflag, size = 0x8, scoped, tag = 'scoped memory for tpu_custom_call.1']
    %8 = vsyncpa [#allocation5], 0
    %s9 = scalar_lea.sflag [#allocation5], 1
    %10 = vsyncpa %s9, 0
    loop: start=0, step=1, limit=4
    $region2: #{tpu_custom_call.1} parent=1 // loop_pre_header
      _
    $region3: #{tpu_custom_call.1} parent=1 // loop_header
      %s12 = sphi 0, %s16
      %p13 = scmp.ge.s32.totalorder %s12, 4
      %s19 = sphi 0, %s31
      %s20 = sphi 0, %s27
      %s21 = sphi 0, %s19
      %s22 = sphi 0, %s20
      %s23 = sphi 0, %s21
      %s24 = sphi 0, %s22
      %s36 = sphi 0, %s38
      %s39 = sphi 0, %s36
      %s40 = sphi 0, %s39
      %s56 = sphi 0, %s40
      %s60 = sphi 0, %s60
      %s62 = sphi 0, %s60
      %s63 = sphi 0, %s62
      %s77 = sphi 0, %s63
      %s81 = sphi 0, %s81
      %s83 = sphi 0, %s81
      %s84 = sphi 0, %s83
      %s98 = sphi 0, %s84
      %s104 = sphi 0, %s106
      %s107 = sphi 0, %s104
      %s108 = sphi 0, %s107
      %s124 = sphi 0, %s108
    $region4: #{tpu_custom_call.1} parent=1 // loop_header_branch
      %15 = sbr.rel (%p13) target = $region8
    $region5: #{tpu_custom_call.1} parent=1 // loop_body
      %s17 = ssub.s32 %s12, 1
      %s18 = ssub.s32 %s12, 2
      %s25 = sadd.s32 1, %s20
      %p26 = scmp.ge.s32.totalorder %s25, 1
      %s27 = scalar_select %p26, 0, %s25
      %s28 = sadd.s32 1, %s19
      %s29 = scalar_select %p26, %s28, %s19
      %p30 = scmp.ge.s32.totalorder %s29, 2
      %s31 = scalar_select %p30, 0, %s29
      %s32 = ssub.s32 %s19, %s31
      %s33 = ssub.s32 %s20, %s27
      %s34 = sor.u32 %s32, %s33
      %p35 = scmp.eq.s32.totalorder %s34, 0
      %s37 = sadd.s32 %s36, 1
      %s38 = scalar_select %p35, %s36, %s37
      %p41 = pneg %p35
      %p42 = scmp.eq.s32.totalorder %s12, 1
      %p43 = por %p41, %p42
      %p44 = scmp.ne.s32.totalorder %s36, %s39
      %p45 = scmp.eq.s32.totalorder %s12, 0
      %p46 = por %p44, %p45
      %p47 = scmp.ne.s32.totalorder %s36, %s39
      %p48 = scmp.eq.s32.totalorder %s17, 1
      %p49 = por %p47, %p48
      %p50 = scmp.ne.s32.totalorder %s39, %s40
      %p51 = scmp.eq.s32.totalorder %s17, 0
      %p52 = por %p50, %p51
      %p53 = scmp.ne.s32.totalorder %s39, %s40
      %p54 = scmp.eq.s32.totalorder %s18, 1
      %p55 = por %p53, %p54
      %p57 = scmp.ne.s32.totalorder %s40, %s56
      %p58 = scmp.eq.s32.totalorder %s18, 0
      %p59 = por %p57, %p58
      %s61 = sadd.s32 %s60, 1
      %p64 = scmp.eq.s32.totalorder %s12, 1
      %p65 = scmp.ne.s32.totalorder %s60, %s62
      %p66 = scmp.eq.s32.totalorder %s12, 0
      %p67 = por %p65, %p66
      %p68 = scmp.ne.s32.totalorder %s60, %s62
      %p69 = scmp.eq.s32.totalorder %s17, 1
      %p70 = por %p68, %p69
      %p71 = scmp.ne.s32.totalorder %s62, %s63
      %p72 = scmp.eq.s32.totalorder %s17, 0
      %p73 = por %p71, %p72
      %p74 = scmp.ne.s32.totalorder %s62, %s63
      %p75 = scmp.eq.s32.totalorder %s18, 1
      %p76 = por %p74, %p75
      %p78 = scmp.ne.s32.totalorder %s63, %s77
      %p79 = scmp.eq.s32.totalorder %s18, 0
      %p80 = por %p78, %p79
      %s82 = sadd.s32 %s81, 1
      %p85 = scmp.eq.s32.totalorder %s12, 1
      %p86 = scmp.ne.s32.totalorder %s81, %s83
      %p87 = scmp.eq.s32.totalorder %s12, 0
      %p88 = por %p86, %p87
      %p89 = scmp.ne.s32.totalorder %s81, %s83
      %p90 = scmp.eq.s32.totalorder %s17, 1
      %p91 = por %p89, %p90
      %p92 = scmp.ne.s32.totalorder %s83, %s84
      %p93 = scmp.eq.s32.totalorder %s17, 0
      %p94 = por %p92, %p93
      %p95 = scmp.ne.s32.totalorder %s83, %s84
      %p96 = scmp.eq.s32.totalorder %s18, 1
      %p97 = por %p95, %p96
      %p99 = scmp.ne.s32.totalorder %s84, %s98
      %p100 = scmp.eq.s32.totalorder %s18, 0
      %p101 = por %p99, %p100
      %s102 = ssub.s32 %s19, %s31
      %p103 = scmp.eq.s32.totalorder %s102, 0
      %s105 = sadd.s32 %s104, 1
      %s106 = scalar_select %p103, %s104, %s105
      %p109 = pneg %p103
      %p110 = scmp.eq.s32.totalorder %s12, 1
      %p111 = por %p109, %p110
      %p112 = scmp.ne.s32.totalorder %s104, %s107
      %p113 = scmp.eq.s32.totalorder %s12, 0
      %p114 = por %p112, %p113
      %p115 = scmp.ne.s32.totalorder %s104, %s107
      %p116 = scmp.eq.s32.totalorder %s17, 1
      %p117 = por %p115, %p116
      %p118 = scmp.ne.s32.totalorder %s107, %s108
      %p119 = scmp.eq.s32.totalorder %s17, 0
      %p120 = por %p118, %p119
      %p121 = scmp.ne.s32.totalorder %s107, %s108
      %p122 = scmp.eq.s32.totalorder %s18, 1
      %p123 = por %p121, %p122
      %p125 = scmp.ne.s32.totalorder %s108, %s124
      %p126 = scmp.eq.s32.totalorder %s18, 0
      %p127 = por %p125, %p126
      %p128 = scmp.le.s32.totalorder 1, %s12
      %p129 = scmp.lt.s32.totalorder %s12, 3
      %p130 = pnand %p128, %p129
      %p131 = pneg %p130
      // Predicated region
      $region9: #{tpu_custom_call.1} parent=5 // pred_check
        _
      $region10: #{tpu_custom_call.1} parent=5 // pred_check_branch
        %133 = sbr.rel (%p130) target = $region12
      $region11: #{tpu_custom_call.1} parent=5 // pred_region
        %s134 = ssub.s32 %s12, 1
        // Predicated region
        $region13: #{tpu_custom_call.1} parent=11 // pred_check
          %p135 = pneg %p73
        $region14: #{tpu_custom_call.1} parent=11 // pred_check_branch
          %137 = sbr.rel (%p135) target = $region16
        $region15: #{tpu_custom_call.1} parent=11 // pred_region
          _
        $region16: #{tpu_custom_call.1} parent=11 // pred_fallthru
          _
        // Predicated region
        $region17: #{tpu_custom_call.1} parent=11 // pred_check
          %p138 = pneg %p94
        $region18: #{tpu_custom_call.1} parent=11 // pred_check_branch
          %140 = sbr.rel (%p138) target = $region20
        $region19: #{tpu_custom_call.1} parent=11 // pred_region
          _
        $region20: #{tpu_custom_call.1} parent=11 // pred_fallthru
          _
      $region12: #{tpu_custom_call.1} parent=5 // pred_fallthru
        _
      %p141 = scmp.lt.s32.totalorder %s12, 2
      // Predicated region
      $region21: #{tpu_custom_call.1} parent=5 // pred_check
        %p142 = pneg %p141
      $region22: #{tpu_custom_call.1} parent=5 // pred_check_branch
        %144 = sbr.rel (%p142) target = $region24
      $region23: #{tpu_custom_call.1} parent=5 // pred_region
        // Predicated region
        $region25: #{tpu_custom_call.1} parent=23 // pred_check
          %p145 = pneg %p46
        $region26: #{tpu_custom_call.1} parent=23 // pred_check_branch
          %147 = sbr.rel (%p145) target = $region28
        $region27: #{tpu_custom_call.1} parent=23 // pred_region
          %s148 = sand.u32 %s36, 1
          %s149 = scalar_lea.sflag [#allocation5], %s148
          %s150 = sand.u32 %s36, 1
          %s151 = smul.addr %s150, 64
          %s152 = scalar_lea.vmem [#allocation4], %s151
          %s153 = smul.u32 2, %s20
          %s155 = ssub.s32 1024, 1024
          %156 = vsyncadd %s149, %s155
          %s157 = smul.addr %s19, 8
          %s158 = sadd.s32 %s153, %s157
          %s159 = smul.addr %s158, 128
          %s160 = scalar_lea.hbm %s0, %s159
          %s161 = sshll.u32 %s152, 4
          %s162 = int_to_ptr.vmem [resolvable:$true] %s161
          %167 = dma.hbm_to_vmem [thread:$0]  %s160, 1024, %s162, %s149, 256, 256, 16
        $region28: #{tpu_custom_call.1} parent=23 // pred_fallthru
          _
      $region24: #{tpu_custom_call.1} parent=5 // pred_fallthru
        _
      %p168 = scmp.le.s32.totalorder 1, %s12
      %p169 = scmp.lt.s32.totalorder %s12, 3
      %p170 = pnand %p168, %p169
      %p171 = pneg %p170
      // Predicated region
      $region29: #{tpu_custom_call.1} parent=5 // pred_check
        _
      $region30: #{tpu_custom_call.1} parent=5 // pred_check_branch
        %173 = sbr.rel (%p170) target = $region32
      $region31: #{tpu_custom_call.1} parent=5 // pred_region
        %s174 = ssub.s32 %s12, 1
        %s175 = sand.u32 %s39, 1
        %s176 = scalar_lea.sflag [#allocation5], %s175
        %s177 = sand.u32 %s39, 1
        %s178 = smul.addr %s177, 64
        %s179 = scalar_lea.vmem [#allocation4], %s178
        // Predicated region
        $region33: #{tpu_custom_call.1} parent=31 // pred_check
          %p180 = pneg %p52
        $region34: #{tpu_custom_call.1} parent=31 // pred_check_branch
          %182 = sbr.rel (%p180) target = $region36
        $region35: #{tpu_custom_call.1} parent=31 // pred_region
          %183 = dma.done %s176, 1024
        $region36: #{tpu_custom_call.1} parent=31 // pred_fallthru
          _
        %s184 = sand.u32 %s39, 1
        %s185 = scalar_lea.sflag [#allocation5], %s184
        %s186 = sand.u32 %s39, 1
        %s187 = smul.addr %s186, 64
        %s188 = scalar_lea.vmem [#allocation4], %s187
        %p189 = pneg %p52
        %p190 = pneg %p49
        %p191 = pneg %p73
        %p192 = pneg %p70
        %p193 = pneg %p94
        %p194 = pneg %p91
        %p195 = pneg %p120
        %p196 = pneg %p117
        %p197 = scmp.lt.s32.totalorder %s21, 1
        %s198 = scalar_select %p197, %s21, 1
        %s199 = smul.addr %s198, 4
        %s200 = smul.addr %s199, 8
        %s201 = scalar_lea.vmem %s3, %s200
        %s202 = smul.u32 2, %s22
        %p203 = scmp.lt.s32.totalorder %s21, 1
        %s204 = scalar_select %p203, %s21, 1
        %s205 = smul.addr %s204, 4
        %s206 = smul.addr %s205, 8
        %s207 = scalar_lea.vmem %s3, %s206
        %p208 = scmp.eq.s32.totalorder %s22, 0
        // Predicated region
        $region37: #{tpu_custom_call.1} parent=31 // pred_check
          %p209 = pneg %p208
        $region38: #{tpu_custom_call.1} parent=31 // pred_check_branch
          %211 = sbr.rel (%p209) target = $region40
        $region39: #{tpu_custom_call.1} parent=31 // pred_region
          %212 = vst [vmem:[#allocation2] sm:$0xff] 0.0
          %213 = vst [vmem:[#allocation2 + $0x8] sm:$0xff] 0.0
          %214 = vst [vmem:[#allocation2 + $0x10] sm:$0xff] 0.0
          %215 = vst [vmem:[#allocation2 + $0x18] sm:$0xff] 0.0
          %216 = vst [vmem:[#allocation3] sm:$0xff] -inf
          %217 = vst [vmem:[#allocation3 + $0x8] sm:$0xff] -inf
          %218 = vst [vmem:[#allocation3 + $0x10] sm:$0xff] -inf
          %219 = vst [vmem:[#allocation3 + $0x18] sm:$0xff] -inf
        $region40: #{tpu_custom_call.1} parent=31 // pred_fallthru
          _
        %v220 = vld [vmem:[%s179] sm:$0xff]
        %v221 = vld [vmem:[%s179 + $0x10] sm:$0xff]
        %v222 = vld [vmem:[%s179 + $0x20] sm:$0xff]
        %v223 = vld [vmem:[%s179 + $0x30] sm:$0xff]
        %v224 = vld [vmem:[%s179 + $0x8] sm:$0xff]
        %v225 = vld [vmem:[%s179 + $0x18] sm:$0xff]
        %v226 = vld [vmem:[%s179 + $0x28] sm:$0xff]
        %v227 = vld [vmem:[%s179 + $0x38] sm:$0xff]
        %v228 = vadd.f32 %v220, %v224
        %v229 = vadd.f32 %v221, %v225
        %v230 = vadd.f32 %v222, %v226
        %v231 = vadd.f32 %v223, %v227
        %v232 = vmax.f32 %v220, %v224
        %v233 = vmax.f32 %v221, %v225
        %v234 = vmax.f32 %v222, %v226
        %v235 = vmax.f32 %v223, %v227
        %v236 = vld [vmem:[#allocation2] sm:$0xff]
        %v237 = vld [vmem:[#allocation2 + $0x8] sm:$0xff]
        %v238 = vld [vmem:[#allocation2 + $0x10] sm:$0xff]
        %v239 = vld [vmem:[#allocation2 + $0x18] sm:$0xff]
        %v240 = vadd.f32 %v236, %v228
        %v241 = vadd.f32 %v237, %v229
        %v242 = vadd.f32 %v238, %v230
        %v243 = vadd.f32 %v239, %v231
        %244 = vst [vmem:[#allocation2] sm:$0xff] %v240
        %245 = vst [vmem:[#allocation2 + $0x8] sm:$0xff] %v241
        %246 = vst [vmem:[#allocation2 + $0x10] sm:$0xff] %v242
        %247 = vst [vmem:[#allocation2 + $0x18] sm:$0xff] %v243
        %v248 = vld [vmem:[#allocation3] sm:$0xff]
        %v249 = vld [vmem:[#allocation3 + $0x8] sm:$0xff]
        %v250 = vld [vmem:[#allocation3 + $0x10] sm:$0xff]
        %v251 = vld [vmem:[#allocation3 + $0x18] sm:$0xff]
        %v252 = vmax.f32 %v248, %v232
        %v253 = vmax.f32 %v249, %v233
        %v254 = vmax.f32 %v250, %v234
        %v255 = vmax.f32 %v251, %v235
        %256 = vst [vmem:[#allocation3] sm:$0xff] %v252
        %257 = vst [vmem:[#allocation3 + $0x8] sm:$0xff] %v253
        %258 = vst [vmem:[#allocation3 + $0x10] sm:$0xff] %v254
        %259 = vst [vmem:[#allocation3 + $0x18] sm:$0xff] %v255
        // Predicated region
        $region41: #{tpu_custom_call.1} parent=31 // pred_check
          %p260 = pneg %p208
        $region42: #{tpu_custom_call.1} parent=31 // pred_check_branch
          %262 = sbr.rel (%p260) target = $region44
        $region43: #{tpu_custom_call.1} parent=31 // pred_region
          %v263 = vld [vmem:[#allocation2] sm:$0xff]
          %v264 = vld [vmem:[#allocation2 + $0x8] sm:$0xff]
          %v265 = vld [vmem:[#allocation2 + $0x10] sm:$0xff]
          %v266 = vld [vmem:[#allocation2 + $0x18] sm:$0xff]
          %267 = vadd.xlane.f32.xlu0 %v263
          %v268 = vpop.xlane.xlu0 %267
          %269 = vadd.xlane.f32.xlu0 %v264
          %v270 = vpop.xlane.xlu0 %269
          %271 = vadd.xlane.f32.xlu0 %v265
          %v272 = vpop.xlane.xlu0 %271
          %273 = vadd.xlane.f32.xlu0 %v266
          %v274 = vpop.xlane.xlu0 %273
          %v275 = vmul.f32 %v268, 0.00390625
          %v276 = vmul.f32 %v270, 0.00390625
          %v277 = vmul.f32 %v272, 0.00390625
          %v278 = vmul.f32 %v274, 0.00390625
          %v279 = vld [vmem:[#allocation3] sm:$0xff]
          %v280 = vld [vmem:[#allocation3 + $0x8] sm:$0xff]
          %v281 = vld [vmem:[#allocation3 + $0x10] sm:$0xff]
          %v282 = vld [vmem:[#allocation3 + $0x18] sm:$0xff]
          %283 = vmax.xlane.f32.xlu0 %v279
          %v284 = vpop.xlane.xlu0 %283
          %285 = vmax.xlane.f32.xlu0 %v280
          %v286 = vpop.xlane.xlu0 %285
          %287 = vmax.xlane.f32.xlu0 %v281
          %v288 = vpop.xlane.xlu0 %287
          %289 = vmax.xlane.f32.xlu0 %v282
          %v290 = vpop.xlane.xlu0 %289
          %v291 = vld [vmem:[%s1] sm:$0x3]
          %v292 = vld [vmem:[%s2] sm:$0xff]
          %v293 = vld [vmem:[%s2 + $0x8] sm:$0xff]
          %v294 = vld [vmem:[%s2 + $0x10] sm:$0xff]
          %v295 = vld [vmem:[%s2 + $0x18] sm:$0xff]
          %vm296 = vcmask 261120
          %v298 = vsel %vm296, %v291, 0
          %300 = vmatprep.subr.mxu0 0.0
          %301 = vmatpush1.msra.mxu0 %v275
          %302 = vmatprep.subr.mxu0 0.0
          %303 = vmatpush1.msra.mxu0 %v276
          %304 = vmatprep.subr.mxu0 0.0
          %305 = vmatpush1.msra.mxu0 %v277
          %306 = vmatprep.subr.mxu0 0.0
          %307 = vmatpush1.msra.mxu0 %v278
          %308 = vmatprep.subr.mxu0 0.0
          %309 = vmatpush1.msra.mxu0 0.0
          %310 = vmatprep.subr.mxu0 0.0
          %311 = vmatpush1.msra.mxu0 0.0
          %312 = vmatprep.subr.mxu0 0.0
          %313 = vmatpush1.msra.mxu0 0.0
          %314 = vmatprep.subr.mxu0 0.0
          %315 = vmatpush1.msra.mxu0 0.0
          %316 = vmatprep.subr.mxu0 0.0
          %317 = vmatpush1.msra.mxu0 0.0
          %318 = vmatprep.subr.mxu0 0.0
          %319 = vmatpush1.msra.mxu0 0.0
          %320 = vmatprep.subr.mxu0 0.0
          %321 = vmatpush1.msra.mxu0 0.0
          %322 = vmatprep.subr.mxu0 0.0
          %323 = vmatpush1.msra.mxu0 0.0
          %324 = vmatprep.subr.mxu0 0.0
          %325 = vmatpush1.msra.mxu0 0.0
          %326 = vmatprep.subr.mxu0 0.0
          %327 = vmatpush1.msra.mxu0 0.0
          %328 = vmatprep.subr.mxu0 0.0
          %329 = vmatpush1.msra.mxu0 0.0
          %330 = vmatprep.subr.mxu0 0.0
          %331 = vmatpush1.msra.mxu0 0.0
          %332 = vmatprep.subr.mxu0 0.0
          %333 = vmatpush1.msra.mxu0 0.0
          %334 = vmatprep.subr.mxu0 0.0
          %335 = vmatpush1.msra.mxu0 0.0
          %336 = vmatprep.subr.mxu0 0.0
          %337 = vmatpush1.msra.mxu0 0.0
          %338 = vmatprep.subr.mxu0 0.0
          %339 = vmatpush1.msra.mxu0 0.0
          %340 = vmatprep.subr.mxu0 0.0
          %341 = vmatpush1.msra.mxu0 0.0
          %342 = vmatprep.subr.mxu0 0.0
          %343 = vmatpush1.msra.mxu0 0.0
          %344 = vmatprep.subr.mxu0 0.0
          %345 = vmatpush1.msra.mxu0 0.0
          %346 = vmatprep.subr.mxu0 0.0
          %347 = vmatpush1.msra.mxu0 0.0
          %348 = vmatprep.subr.mxu0 0.0
          %349 = vmatpush1.msra.mxu0 0.0
          %350 = vmatprep.subr.mxu0 0.0
          %351 = vmatpush1.msra.mxu0 0.0
          %352 = vmatprep.subr.mxu0 0.0
          %353 = vmatpush1.msra.mxu0 0.0
          %354 = vmatprep.subr.mxu0 0.0
          %355 = vmatpush1.msra.mxu0 0.0
          %356 = vmatprep.subr.mxu0 0.0
          %357 = vmatpush1.msra.mxu0 0.0
          %358 = vmatprep.subr.mxu0 0.0
          %359 = vmatpush1.msra.mxu0 0.0
          %360 = vmatprep.subr.mxu0 0.0
          %361 = vmatpush1.msra.mxu0 0.0
          %362 = vmatprep.subr.mxu0 0.0
          %363 = vmatpush1.msra.mxu0 0.0
          %364 = vmatprep.mubr.f32.mxu0 0.0
          %365 = vmatmul.mubr.f32.gmra.mrb[0].mxu0 %v298
          %v366 = vpop.f32.mrb[0].mxu0
          %v367 = vadd.f32 0.0, %v366
          %v368 = vpop.f32.mrb[0].mxu0
          %369 = vdwg.mxu0
          %v370 = vmax.f32 %v367, 0.0
          %371 = vmatprep.subr.mxu0 0.0
          %372 = vmatpush1.msra.mxu0 %v284
          %373 = vmatprep.subr.mxu0 0.0
          %374 = vmatpush1.msra.mxu0 %v286
          %375 = vmatprep.subr.mxu0 0.0
          %376 = vmatpush1.msra.mxu0 %v288
          %377 = vmatprep.subr.mxu0 0.0
          %378 = vmatpush1.msra.mxu0 %v290
          %379 = vmatprep.subr.mxu0 0.0
          %380 = vmatpush1.msra.mxu0 0.0
          %381 = vmatprep.subr.mxu0 0.0
          %382 = vmatpush1.msra.mxu0 0.0
          %383 = vmatprep.subr.mxu0 0.0
          %384 = vmatpush1.msra.mxu0 0.0
          %385 = vmatprep.subr.mxu0 0.0
          %386 = vmatpush1.msra.mxu0 0.0
          %387 = vmatprep.subr.mxu0 0.0
          %388 = vmatpush1.msra.mxu0 0.0
          %389 = vmatprep.subr.mxu0 0.0
          %390 = vmatpush1.msra.mxu0 0.0
          %391 = vmatprep.subr.mxu0 0.0
          %392 = vmatpush1.msra.mxu0 0.0
          %393 = vmatprep.subr.mxu0 0.0
          %394 = vmatpush1.msra.mxu0 0.0
          %395 = vmatprep.subr.mxu0 0.0
          %396 = vmatpush1.msra.mxu0 0.0
          %397 = vmatprep.subr.mxu0 0.0
          %398 = vmatpush1.msra.mxu0 0.0
          %399 = vmatprep.subr.mxu0 0.0
          %400 = vmatpush1.msra.mxu0 0.0
          %401 = vmatprep.subr.mxu0 0.0
          %402 = vmatpush1.msra.mxu0 0.0
          %403 = vmatprep.subr.mxu0 0.0
          %404 = vmatpush1.msra.mxu0 0.0
          %405 = vmatprep.subr.mxu0 0.0
          %406 = vmatpush1.msra.mxu0 0.0
          %407 = vmatprep.subr.mxu0 0.0
          %408 = vmatpush1.msra.mxu0 0.0
          %409 = vmatprep.subr.mxu0 0.0
          %410 = vmatpush1.msra.mxu0 0.0
          %411 = vmatprep.subr.mxu0 0.0
          %412 = vmatpush1.msra.mxu0 0.0
          %413 = vmatprep.subr.mxu0 0.0
          %414 = vmatpush1.msra.mxu0 0.0
          %415 = vmatprep.subr.mxu0 0.0
          %416 = vmatpush1.msra.mxu0 0.0
          %417 = vmatprep.subr.mxu0 0.0
          %418 = vmatpush1.msra.mxu0 0.0
          %419 = vmatprep.subr.mxu0 0.0
          %420 = vmatpush1.msra.mxu0 0.0
          %421 = vmatprep.subr.mxu0 0.0
          %422 = vmatpush1.msra.mxu0 0.0
          %423 = vmatprep.subr.mxu0 0.0
          %424 = vmatpush1.msra.mxu0 0.0
          %425 = vmatprep.subr.mxu0 0.0
          %426 = vmatpush1.msra.mxu0 0.0
          %427 = vmatprep.subr.mxu0 0.0
          %428 = vmatpush1.msra.mxu0 0.0
          %429 = vmatprep.subr.mxu0 0.0
          %430 = vmatpush1.msra.mxu0 0.0
          %431 = vmatprep.subr.mxu0 0.0
          %432 = vmatpush1.msra.mxu0 0.0
          %433 = vmatprep.subr.mxu0 0.0
          %434 = vmatpush1.msra.mxu0 0.0
          %435 = vmatprep.mubr.f32.mxu0 0.0
          %436 = vmatmul.mubr.f32.gmra.mrb[0].mxu0 %v298
          %v437 = vpop.f32.mrb[0].mxu0
          %v438 = vadd.f32 0.0, %v437
          %v439 = vpop.f32.mrb[0].mxu0
          %440 = vdwg.mxu0
          %v441 = vmax.f32 %v438, 0.0
          %v442 = vadd.f32 %v370, %v441
          %vm443 = vcmask 15360
          %v445 = vsel %vm443, %v292, 0
          %v448 = vsel %vm443, %v293, 0
          %v451 = vsel %vm443, %v294, 0
          %v454 = vsel %vm443, %v295, 0
          %vm456 = vcmask 1041408
          %v458 = vsel %vm456, %v442, 0
          %460 = vmatprep.subr.mxu0 0.0
          %461 = vmatpush1.msra.mxu0 %v458
          %462 = vmatprep.subr.mxu0 0.0
          %463 = vmatpush1.msra.mxu0 0.0
          %464 = vmatprep.subr.mxu0 0.0
          %465 = vmatpush1.msra.mxu0 0.0
          %466 = vmatprep.subr.mxu0 0.0
          %467 = vmatpush1.msra.mxu0 0.0
          %468 = vmatprep.subr.mxu0 0.0
          %469 = vmatpush1.msra.mxu0 0.0
          %470 = vmatprep.subr.mxu0 0.0
          %471 = vmatpush1.msra.mxu0 0.0
          %472 = vmatprep.subr.mxu0 0.0
          %473 = vmatpush1.msra.mxu0 0.0
          %474 = vmatprep.subr.mxu0 0.0
          %475 = vmatpush1.msra.mxu0 0.0
          %476 = vmatprep.subr.mxu0 0.0
          %477 = vmatpush1.msra.mxu0 0.0
          %478 = vmatprep.subr.mxu0 0.0
          %479 = vmatpush1.msra.mxu0 0.0
          %480 = vmatprep.subr.mxu0 0.0
          %481 = vmatpush1.msra.mxu0 0.0
          %482 = vmatprep.subr.mxu0 0.0
          %483 = vmatpush1.msra.mxu0 0.0
          %484 = vmatprep.subr.mxu0 0.0
          %485 = vmatpush1.msra.mxu0 0.0
          %486 = vmatprep.subr.mxu0 0.0
          %487 = vmatpush1.msra.mxu0 0.0
          %488 = vmatprep.subr.mxu0 0.0
          %489 = vmatpush1.msra.mxu0 0.0
          %490 = vmatprep.subr.mxu0 0.0
          %491 = vmatpush1.msra.mxu0 0.0
          %492 = vmatprep.subr.mxu0 0.0
          %493 = vmatpush1.msra.mxu0 0.0
          %494 = vmatprep.subr.mxu0 0.0
          %495 = vmatpush1.msra.mxu0 0.0
          %496 = vmatprep.subr.mxu0 0.0
          %497 = vmatpush1.msra.mxu0 0.0
          %498 = vmatprep.subr.mxu0 0.0
          %499 = vmatpush1.msra.mxu0 0.0
          %500 = vmatprep.subr.mxu0 0.0
          %501 = vmatpush1.msra.mxu0 0.0
          %502 = vmatprep.subr.mxu0 0.0
          %503 = vmatpush1.msra.mxu0 0.0
          %504 = vmatprep.subr.mxu0 0.0
          %505 = vmatpush1.msra.mxu0 0.0
          %506 = vmatprep.subr.mxu0 0.0
          %507 = vmatpush1.msra.mxu0 0.0
          %508 = vmatprep.subr.mxu0 0.0
          %509 = vmatpush1.msra.mxu0 0.0
          %510 = vmatprep.subr.mxu0 0.0
          %511 = vmatpush1.msra.mxu0 0.0
          %512 = vmatprep.subr.mxu0 0.0
          %513 = vmatpush1.msra.mxu0 0.0
          %514 = vmatprep.subr.mxu0 0.0
          %515 = vmatpush1.msra.mxu0 0.0
          %516 = vmatprep.subr.mxu0 0.0
          %517 = vmatpush1.msra.mxu0 0.0
          %518 = vmatprep.subr.mxu0 0.0
          %519 = vmatpush1.msra.mxu0 0.0
          %520 = vmatprep.subr.mxu0 0.0
          %521 = vmatpush1.msra.mxu0 0.0
          %522 = vmatprep.subr.mxu0 0.0
          %523 = vmatpush1.msra.mxu0 0.0
          %524 = vmatprep.mubr.f32.mxu0 0.0
          %525 = vmatmul.mubr.f32.gmra.mrb[0].mxu0 %v445
          %v526 = vpop.f32.mrb[0].mxu0
          %v527 = vadd.f32 0.0, %v526
          %v528 = vpop.f32.mrb[0].mxu0
          %529 = vmatprep.mubr.f32.mxu0 0.0
          %530 = vmatmul.mubr.f32.gmra.mrb[0].mxu0 %v448
          %v531 = vpop.f32.mrb[0].mxu0
          %v532 = vadd.f32 0.0, %v531
          %v533 = vpop.f32.mrb[0].mxu0
          %534 = vmatprep.mubr.f32.mxu0 0.0
          %535 = vmatmul.mubr.f32.gmra.mrb[0].mxu0 %v451
          %v536 = vpop.f32.mrb[0].mxu0
          %v537 = vadd.f32 0.0, %v536
          %v538 = vpop.f32.mrb[0].mxu0
          %539 = vmatprep.mubr.f32.mxu0 0.0
          %540 = vmatmul.mubr.f32.gmra.mrb[0].mxu0 %v454
          %v541 = vpop.f32.mrb[0].mxu0
          %v542 = vadd.f32 0.0, %v541
          %v543 = vpop.f32.mrb[0].mxu0
          %544 = vdwg.mxu0
          %v545 = vxor.u32 %v527, 2147483648
          %v546 = vxor.u32 %v532, 2147483648
          %v547 = vxor.u32 %v537, 2147483648
          %v548 = vxor.u32 %v542, 2147483648
          %v549 = vmul.f32 %v545, 1.442695
          %v550 = vpow.pop %v549
          %v551 = vmul.f32 %v546, 1.442695
          %v552 = vpow.pop %v551
          %v553 = vmul.f32 %v547, 1.442695
          %v554 = vpow.pop %v553
          %v555 = vmul.f32 %v548, 1.442695
          %v556 = vpow.pop %v555
          %v557 = vadd.f32 %v550, 1.0
          %v558 = vadd.f32 %v552, 1.0
          %v559 = vadd.f32 %v554, 1.0
          %v560 = vadd.f32 %v556, 1.0
          %v561 = vrcp.pop %v557
          %v562 = vmul.f32 1.0, %v561
          %v563 = vrcp.pop %v558
          %v564 = vmul.f32 1.0, %v563
          %v565 = vrcp.pop %v559
          %v566 = vmul.f32 1.0, %v565
          %v567 = vrcp.pop %v560
          %v568 = vmul.f32 1.0, %v567
          %vm569 = vcmask 7168
          %570 = vst.msk [vmem:[%s207] sm:$0xff] %vm569, %v562
          %571 = vst.msk [vmem:[%s207 + $0x8] sm:$0xff] %vm569, %v564
          %572 = vst.msk [vmem:[%s207 + $0x10] sm:$0xff] %vm569, %v566
          %573 = vst.msk [vmem:[%s207 + $0x18] sm:$0xff] %vm569, %v568
        $region44: #{tpu_custom_call.1} parent=31 // pred_fallthru
          _
        %p574 = scmp.lt.s32.totalorder %s21, 1
        %s575 = scalar_select %p574, %s21, 1
        %s576 = smul.addr %s575, 4
        %s577 = smul.addr %s576, 8
        %s578 = scalar_lea.vmem %s3, %s577
        // Predicated region
        $region45: #{tpu_custom_call.1} parent=31 // pred_check
          %p579 = pneg %p117
        $region46: #{tpu_custom_call.1} parent=31 // pred_check_branch
          %581 = sbr.rel (%p579) target = $region48
        $region47: #{tpu_custom_call.1} parent=31 // pred_region
          _
        $region48: #{tpu_custom_call.1} parent=31 // pred_fallthru
          _
      $region32: #{tpu_custom_call.1} parent=5 // pred_fallthru
        _
      %p582 = scmp.le.s32.totalorder 2, %s12
      // Predicated region
      $region49: #{tpu_custom_call.1} parent=5 // pred_check
        %p583 = pneg %p582
      $region50: #{tpu_custom_call.1} parent=5 // pred_check_branch
        %585 = sbr.rel (%p583) target = $region52
      $region51: #{tpu_custom_call.1} parent=5 // pred_region
        %s586 = ssub.s32 %s12, 2
        // Predicated region
        $region53: #{tpu_custom_call.1} parent=51 // pred_check
          %p587 = pneg %p123
        $region54: #{tpu_custom_call.1} parent=51 // pred_check_branch
          %589 = sbr.rel (%p587) target = $region56
        $region55: #{tpu_custom_call.1} parent=51 // pred_region
          %p590 = scmp.lt.s32.totalorder %s23, 1
          %s591 = scalar_select %p590, %s23, 1
          %s592 = smul.addr %s591, 4
          %s593 = smul.addr %s592, 8
          %s594 = scalar_lea.vmem %s3, %s593
        $region56: #{tpu_custom_call.1} parent=51 // pred_fallthru
          _
      $region52: #{tpu_custom_call.1} parent=5 // pred_fallthru
        _
    $region6: #{tpu_custom_call.1} parent=1 // loop_footer
      %s16 = sadd.s32 1, %s12
    $region7: #{tpu_custom_call.1} parent=1 // loop_footer_branch
      %11 = sbr.rel target = $region3
    $region8: #{tpu_custom_call.1} parent=1 // loop_exit
      _
    %595 = vsyncpa [#allocation5], 1
    %s596 = scalar_lea.sflag [#allocation5], 1
    %597 = vsyncpa %s596, 1

</llo_original>
